<compile_context>
chip_gen: v5e
topology: v5e:2x2
jax: 0.10.0
libtpu: 0.0.40
codegen_flags: <defaults>
</compile_context>

<pallas_src>
import math

import jax
import jax.numpy as jnp
from jax.experimental import pallas as pl
from jax.experimental.pallas import tpu as pltpu

# ---- model hyperparameters (small, consistent with the module) ----
B = 2            # batch
S = 8            # seq length
E = 32           # embed_dim
H = 8            # n_heads
D = E // H       # single_head_dim = 4
EXP = 4          # expansion_factor
FF = EXP * E     # 128
EPS = 1e-5       # nn.LayerNorm default

BS = B * S       # 16  rows of the flattened activation slab
BHS = B * H * S  # 128 block-diagonal attention columns (exactly one lane group)


def _layernorm(x, gamma, beta):
    mu = jnp.mean(x, axis=-1, keepdims=True)
    var = jnp.mean((x - mu) ** 2, axis=-1, keepdims=True)
    return (x - mu) * jax.lax.rsqrt(var + EPS) * gamma + beta


def transformer_block_kernel(
    x_ref,                     # (BS, E)
    wq_ref, wk_ref, wv_ref,    # (E, E) each; wq pre-scaled by 1/sqrt(D)
    wo_ref, bo_ref,            # (E, E), (1, E)
    g1_ref, b1_ref,            # (1, E) layernorm1
    w1_ref, bias1_ref,         # (E, FF), (1, FF)
    w2_ref, bias2_ref,         # (FF, E), (1, E)
    g2_ref, b2_ref,            # (1, E) layernorm2
    gsel_ref,                  # (BHS, BS)  constant row-gather matrix
    hm_ref,                    # (BHS, E)   constant head block-diagonal mask
    bm_ref,                    # (BS, BHS)  constant batch-validity mask
    bones_ref,                 # (BHS, BHS) constant same-(batch,head)-block indicator
    o_ref,                     # (BS, E)
):
    x = x_ref[...]                                                       # (16, 32) f32

    # ---- projections (scale already folded into wq) ----
    q = jnp.dot(x, wq_ref[...], preferred_element_type=jnp.float32)      # (16, 32)
    k = jnp.dot(x, wk_ref[...], preferred_element_type=jnp.float32)
    v = jnp.dot(x, wv_ref[...], preferred_element_type=jnp.float32)

    # ---- block-diagonal multi-head attention (2 structural matmuls + 3 MXU ops) ----
    gsel = gsel_ref[...]
    hm = hm_ref[...]
    kbd_t = jnp.dot(gsel, k, preferred_element_type=jnp.float32) * hm    # (128, 32)
    vbd = jnp.dot(gsel, v, preferred_element_type=jnp.float32) * hm      # (128, 32)

    # scores[r, c] = <q_row r restricted to head(c), k_row src(c)>  for all (b, h) blocks
    scores = jnp.dot(q, kbd_t.T, preferred_element_type=jnp.float32)     # (16, 128)

    bm = bm_ref[...]
    m = jnp.max(scores, axis=-1, keepdims=True)       # per-row constant -> exact softmax
    p = jnp.exp(scores - m) * bm                      # zero cross-batch garbage entries
    # per-(batch, head)-block denominators, broadcast back onto the 128 columns via MXU
    denom = jnp.dot(p, bones_ref[...], preferred_element_type=jnp.float32)
    attn_w = p * pl.reciprocal(denom + (1.0 - bm), approx=False)
    attn = jnp.dot(attn_w, vbd, preferred_element_type=jnp.float32)      # (16, 32)

    attn = jnp.dot(attn, wo_ref[...], preferred_element_type=jnp.float32) + bo_ref[...]

    # ---- residual + layernorm1 ----
    x1 = _layernorm(x + attn, g1_ref[...], b1_ref[...])                  # (16, 32)

    # ---- feed-forward ----
    hdn = jnp.dot(x1, w1_ref[...], preferred_element_type=jnp.float32) + bias1_ref[...]
    hdn = jnp.maximum(hdn, 0.0)
    ff = jnp.dot(hdn, w2_ref[...], preferred_element_type=jnp.float32) + bias2_ref[...]

    # ---- residual + layernorm2 ----
    o_ref[...] = _layernorm(x1 + ff, g2_ref[...], b2_ref[...]).astype(o_ref.dtype)


def _attention_constants():
    """Host-side constant matrices encoding the block-diagonal attention layout."""
    c = jnp.arange(BHS)
    r_src = (c // (H * S)) * S + (c % S)      # source row in the (BS, E) slab for column c
    h_of_c = (c // S) % H                     # head owning column c
    b_of_c = c // (H * S)                     # batch owning column c
    rows = jnp.arange(BS)

    gsel = (r_src[:, None] == rows[None, :]).astype(jnp.float32)                  # (128, 16)
    hm = (h_of_c[:, None] == (jnp.arange(E)[None, :] // D)).astype(jnp.float32)   # (128, 32)
    bm = ((rows[:, None] // S) == b_of_c[None, :]).astype(jnp.float32)            # (16, 128)
    bones = ((c[:, None] // S) == (c[None, :] // S)).astype(jnp.float32)          # (128, 128)
    return gsel, hm, bm, bones


def transformer_block(x, params):
    (wq, wk, wv, wo, bo, g1, b1, w1, bias1, w2, bias2, g2, b2) = params
    gsel, hm, bm, bones = _attention_constants()

    x2d = x.reshape(BS, E)
    inputs = (x2d, wq, wk, wv, wo, bo, g1, b1, w1, bias1, w2, bias2, g2, b2,
              gsel, hm, bm, bones)

    def full_spec(arr):
        nd = arr.ndim
        return pl.BlockSpec(arr.shape, lambda i, _nd=nd: (0,) * _nd)

    out2d = pl.pallas_call(
        transformer_block_kernel,
        out_shape=jax.ShapeDtypeStruct((BS, E), jnp.float32),
        grid_spec=pltpu.PrefetchScalarGridSpec(
            num_scalar_prefetch=0,
            grid=(1,),  # single step: total work is tiny; avoid per-step pipeline overhead
            in_specs=[full_spec(a) for a in inputs],
            out_specs=pl.BlockSpec((BS, E), lambda i: (0, 0)),
        ),
        compiler_params=pltpu.CompilerParams(dimension_semantics=("arbitrary",)),
    )(*inputs)
    return out2d.reshape(B, S, E)


def reference(x, params):
    """Pure-JAX reference (dropout in eval mode = identity)."""
    (wqkv, wo, bo, g1, b1, w1, bias1, w2, bias2, g2, b2) = params

    def ln(z, g, b):
        mu = jnp.mean(z, -1, keepdims=True)
        var = jnp.mean((z - mu) ** 2, -1, keepdims=True)
        return (z - mu) / jnp.sqrt(var + EPS) * g + b

    qkv = x @ wqkv                                  # (B,S,3E)
    qkv = qkv.reshape(B, S, 3, H, D).transpose(2, 0, 3, 1, 4)
    q, k, v = qkv[0], qkv[1], qkv[2]                # (B,H,S,D)
    scores = jnp.einsum("bhqd,bhkd->bhqk", q, k) / math.sqrt(D)
    w = jax.nn.softmax(scores, axis=-1)
    attn = jnp.einsum("bhqk,bhkd->bhqd", w, v).transpose(0, 2, 1, 3).reshape(B, S, E)
    attn = attn @ wo + bo
    x1 = ln(x + attn, g1, b1)
    ff = jnp.maximum(x1 @ w1 + bias1, 0.0) @ w2 + bias2
    return ln(x1 + ff, g2, b2)


if __name__ == "__main__":
    key = jax.random.PRNGKey(0)
    ks = jax.random.split(key, 12)

    x = jax.random.normal(ks[0], (B, S, E), jnp.float32)

    # Parameters (deterministic init). Linear weights stored already-transposed
    # (in_features, out_features) so the kernel does x @ W.
    wqkv = jax.random.normal(ks[1], (E, 3 * E), jnp.float32) * 0.1
    wo = jax.random.normal(ks[2], (E, E), jnp.float32) * 0.1
    bo = jax.random.normal(ks[3], (1, E), jnp.float32) * 0.1
    g1 = jnp.ones((1, E), jnp.float32)
    b1 = jnp.zeros((1, E), jnp.float32)
    w1 = jax.random.normal(ks[4], (E, FF), jnp.float32) * 0.1
    bias1 = jax.random.normal(ks[5], (1, FF), jnp.float32) * 0.1
    w2 = jax.random.normal(ks[6], (FF, E), jnp.float32) * 0.1
    bias2 = jax.random.normal(ks[7], (1, E), jnp.float32) * 0.1
    g2 = jnp.ones((1, E), jnp.float32)
    b2 = jnp.zeros((1, E), jnp.float32)

    # Kernel params: split the fused qkv weight into separate refs and fold the
    # 1/sqrt(D) attention scale into the Q projection (host-side constant transform).
    scale = 1.0 / math.sqrt(D)
    wq = wqkv[:, 0 * E:1 * E] * scale
    wk = wqkv[:, 1 * E:2 * E]
    wv = wqkv[:, 2 * E:3 * E]
    kparams = (wq, wk, wv, wo, bo, g1, b1, w1, bias1, w2, bias2, g2, b2)

    out = transformer_block(x, kparams)
    out = jax.block_until_ready(out)

    ref = reference(x, (wqkv, wo, bo, g1, b1, w1, bias1, w2, bias2, g2, b2))
    assert out.shape == (B, S, E)
    assert jnp.allclose(out, ref, atol=1e-4, rtol=1e-4), "mismatch vs pure-JAX reference"

    print("KERNEL_OK")
</pallas_src>

<mosaic_0001>
module attributes {stable_mosaic.version = 11 : i64} {
  func.func @transformer_block_kernel(%arg0: i32, %arg1: memref<16x32xf32, #tpu.memory_space<vmem>>, %arg2: memref<32x32xf32, #tpu.memory_space<vmem>>, %arg3: memref<32x32xf32, #tpu.memory_space<vmem>>, %arg4: memref<32x32xf32, #tpu.memory_space<vmem>>, %arg5: memref<32x32xf32, #tpu.memory_space<vmem>>, %arg6: memref<1x32xf32, #tpu.memory_space<vmem>>, %arg7: memref<1x32xf32, #tpu.memory_space<vmem>>, %arg8: memref<1x32xf32, #tpu.memory_space<vmem>>, %arg9: memref<32x128xf32, #tpu.memory_space<vmem>>, %arg10: memref<1x128xf32, #tpu.memory_space<vmem>>, %arg11: memref<128x32xf32, #tpu.memory_space<vmem>>, %arg12: memref<1x32xf32, #tpu.memory_space<vmem>>, %arg13: memref<1x32xf32, #tpu.memory_space<vmem>>, %arg14: memref<1x32xf32, #tpu.memory_space<vmem>>, %arg15: memref<128x16xf32, #tpu.memory_space<vmem>>, %arg16: memref<128x32xf32, #tpu.memory_space<vmem>>, %arg17: memref<16x128xf32, #tpu.memory_space<vmem>>, %arg18: memref<128x128xf32, #tpu.memory_space<vmem>>, %arg19: memref<16x32xf32, #tpu.memory_space<vmem>>) attributes {dimension_semantics = [#tpu.dimension_semantics<arbitrary>], iteration_bounds = array<i64: 1>, scalar_prefetch = 0 : i64, scratch_operands = 0 : i64, tpu.core_type = #tpu.core_type<tc>, window_params = [{pipeline_mode = #tpu.pipeline_mode<synchronous>, transform_indices = @transform_0, window_bounds = array<i64: 16, 32>}, {pipeline_mode = #tpu.pipeline_mode<synchronous>, transform_indices = @transform_1, window_bounds = array<i64: 32, 32>}, {pipeline_mode = #tpu.pipeline_mode<synchronous>, transform_indices = @transform_2, window_bounds = array<i64: 32, 32>}, {pipeline_mode = #tpu.pipeline_mode<synchronous>, transform_indices = @transform_3, window_bounds = array<i64: 32, 32>}, {pipeline_mode = #tpu.pipeline_mode<synchronous>, transform_indices = @transform_4, window_bounds = array<i64: 32, 32>}, {pipeline_mode = #tpu.pipeline_mode<synchronous>, transform_indices = @transform_5, window_bounds = array<i64: 1, 32>}, {pipeline_mode = #tpu.pipeline_mode<synchronous>, transform_indices = @transform_6, window_bounds = array<i64: 1, 32>}, {pipeline_mode = #tpu.pipeline_mode<synchronous>, transform_indices = @transform_7, window_bounds = array<i64: 1, 32>}, {pipeline_mode = #tpu.pipeline_mode<synchronous>, transform_indices = @transform_8, window_bounds = array<i64: 32, 128>}, {pipeline_mode = #tpu.pipeline_mode<synchronous>, transform_indices = @transform_9, window_bounds = array<i64: 1, 128>}, {pipeline_mode = #tpu.pipeline_mode<synchronous>, transform_indices = @transform_10, window_bounds = array<i64: 128, 32>}, {pipeline_mode = #tpu.pipeline_mode<synchronous>, transform_indices = @transform_11, window_bounds = array<i64: 1, 32>}, {pipeline_mode = #tpu.pipeline_mode<synchronous>, transform_indices = @transform_12, window_bounds = array<i64: 1, 32>}, {pipeline_mode = #tpu.pipeline_mode<synchronous>, transform_indices = @transform_13, window_bounds = array<i64: 1, 32>}, {pipeline_mode = #tpu.pipeline_mode<synchronous>, transform_indices = @transform_14, window_bounds = array<i64: 128, 16>}, {pipeline_mode = #tpu.pipeline_mode<synchronous>, transform_indices = @transform_15, window_bounds = array<i64: 128, 32>}, {pipeline_mode = #tpu.pipeline_mode<synchronous>, transform_indices = @transform_16, window_bounds = array<i64: 16, 128>}, {pipeline_mode = #tpu.pipeline_mode<synchronous>, transform_indices = @transform_17, window_bounds = array<i64: 128, 128>}, {pipeline_mode = #tpu.pipeline_mode<synchronous>, transform_indices = @transform_18, window_bounds = array<i64: 16, 32>}]} {
    %c0 = arith.constant 0 : index
    %c0_0 = arith.constant 0 : index
    %0 = vector.load %arg1[%c0, %c0_0] : memref<16x32xf32, #tpu.memory_space<vmem>>, vector<16x32xf32>
    %c0_1 = arith.constant 0 : index
    %c0_2 = arith.constant 0 : index
    %1 = vector.load %arg2[%c0_1, %c0_2] : memref<32x32xf32, #tpu.memory_space<vmem>>, vector<32x32xf32>
    %cst = arith.constant dense<0.000000e+00> : vector<16x32xf32>
    %2 = tpu.matmul %0, %1, %cst {dimension_numbers = #tpu.dot_dimension_numbers<[1], [0], [0], [1], [0, 0, 1, 1], [], []>} : vector<16x32xf32>, vector<32x32xf32>, vector<16x32xf32> -> vector<16x32xf32>
    %c0_3 = arith.constant 0 : index
    %c0_4 = arith.constant 0 : index
    %3 = vector.load %arg3[%c0_3, %c0_4] : memref<32x32xf32, #tpu.memory_space<vmem>>, vector<32x32xf32>
    %cst_5 = arith.constant dense<0.000000e+00> : vector<16x32xf32>
    %4 = tpu.matmul %0, %3, %cst_5 {dimension_numbers = #tpu.dot_dimension_numbers<[1], [0], [0], [1], [0, 0, 1, 1], [], []>} : vector<16x32xf32>, vector<32x32xf32>, vector<16x32xf32> -> vector<16x32xf32>
    %c0_6 = arith.constant 0 : index
    %c0_7 = arith.constant 0 : index
    %5 = vector.load %arg4[%c0_6, %c0_7] : memref<32x32xf32, #tpu.memory_space<vmem>>, vector<32x32xf32>
    %cst_8 = arith.constant dense<0.000000e+00> : vector<16x32xf32>
    %6 = tpu.matmul %0, %5, %cst_8 {dimension_numbers = #tpu.dot_dimension_numbers<[1], [0], [0], [1], [0, 0, 1, 1], [], []>} : vector<16x32xf32>, vector<32x32xf32>, vector<16x32xf32> -> vector<16x32xf32>
    %c0_9 = arith.constant 0 : index
    %c0_10 = arith.constant 0 : index
    %7 = vector.load %arg15[%c0_9, %c0_10] : memref<128x16xf32, #tpu.memory_space<vmem>>, vector<128x16xf32>
    %c0_11 = arith.constant 0 : index
    %c0_12 = arith.constant 0 : index
    %8 = vector.load %arg16[%c0_11, %c0_12] : memref<128x32xf32, #tpu.memory_space<vmem>>, vector<128x32xf32>
    %cst_13 = arith.constant dense<0.000000e+00> : vector<128x32xf32>
    %9 = tpu.matmul %7, %4, %cst_13 {dimension_numbers = #tpu.dot_dimension_numbers<[1], [0], [0], [1], [0, 0, 1, 1], [], []>} : vector<128x16xf32>, vector<16x32xf32>, vector<128x32xf32> -> vector<128x32xf32>
    %10 = arith.mulf %9, %8 : vector<128x32xf32>
    %cst_14 = arith.constant dense<0.000000e+00> : vector<128x32xf32>
    %11 = tpu.matmul %7, %6, %cst_14 {dimension_numbers = #tpu.dot_dimension_numbers<[1], [0], [0], [1], [0, 0, 1, 1], [], []>} : vector<128x16xf32>, vector<16x32xf32>, vector<128x32xf32> -> vector<128x32xf32>
    %12 = arith.mulf %11, %8 : vector<128x32xf32>
    %13 = tpu.transpose %10, [1, 0] : vector<128x32xf32> -> vector<32x128xf32>
    %cst_15 = arith.constant dense<0.000000e+00> : vector<16x128xf32>
    %14 = tpu.matmul %2, %13, %cst_15 {dimension_numbers = #tpu.dot_dimension_numbers<[1], [0], [0], [1], [0, 0, 1, 1], [], []>} : vector<16x32xf32>, vector<32x128xf32>, vector<16x128xf32> -> vector<16x128xf32>
    %c0_16 = arith.constant 0 : index
    %c0_17 = arith.constant 0 : index
    %15 = vector.load %arg17[%c0_16, %c0_17] : memref<16x128xf32, #tpu.memory_space<vmem>>, vector<16x128xf32>
    %cst_18 = arith.constant dense<0xFF800000> : vector<16xf32>
    %16 = vector.multi_reduction <maximumf>, %14, %cst_18 [1] : vector<16x128xf32> to vector<16xf32>
    %17 = vector.shape_cast %16 : vector<16xf32> to vector<16x1xf32>
    %18 = vector.broadcast %17 : vector<16x1xf32> to vector<16x128xf32>
    %19 = arith.subf %14, %18 : vector<16x128xf32>
    %20 = math.exp %19 : vector<16x128xf32>
    %21 = arith.mulf %20, %15 : vector<16x128xf32>
    %c0_19 = arith.constant 0 : index
    %c0_20 = arith.constant 0 : index
    %22 = vector.load %arg18[%c0_19, %c0_20] : memref<128x128xf32, #tpu.memory_space<vmem>>, vector<128x128xf32>
    %cst_21 = arith.constant dense<0.000000e+00> : vector<16x128xf32>
    %23 = tpu.matmul %21, %22, %cst_21 {dimension_numbers = #tpu.dot_dimension_numbers<[1], [0], [0], [1], [0, 0, 1, 1], [], []>} : vector<16x128xf32>, vector<128x128xf32>, vector<16x128xf32> -> vector<16x128xf32>
    %cst_22 = arith.constant 1.000000e+00 : f32
    %24 = vector.broadcast %cst_22 : f32 to vector<16x128xf32>
    %25 = arith.subf %24, %15 : vector<16x128xf32>
    %26 = arith.addf %23, %25 : vector<16x128xf32>
    %27 = tpu.reciprocal %26 : vector<16x128xf32> -> vector<16x128xf32>
    %28 = arith.mulf %21, %27 : vector<16x128xf32>
    %cst_23 = arith.constant dense<0.000000e+00> : vector<16x32xf32>
    %29 = tpu.matmul %28, %12, %cst_23 {dimension_numbers = #tpu.dot_dimension_numbers<[1], [0], [0], [1], [0, 0, 1, 1], [], []>} : vector<16x128xf32>, vector<128x32xf32>, vector<16x32xf32> -> vector<16x32xf32>
    %c0_24 = arith.constant 0 : index
    %c0_25 = arith.constant 0 : index
    %30 = vector.load %arg5[%c0_24, %c0_25] : memref<32x32xf32, #tpu.memory_space<vmem>>, vector<32x32xf32>
    %cst_26 = arith.constant dense<0.000000e+00> : vector<16x32xf32>
    %31 = tpu.matmul %29, %30, %cst_26 {dimension_numbers = #tpu.dot_dimension_numbers<[1], [0], [0], [1], [0, 0, 1, 1], [], []>} : vector<16x32xf32>, vector<32x32xf32>, vector<16x32xf32> -> vector<16x32xf32>
    %c0_27 = arith.constant 0 : index
    %c0_28 = arith.constant 0 : index
    %32 = vector.load %arg6[%c0_27, %c0_28] : memref<1x32xf32, #tpu.memory_space<vmem>>, vector<1x32xf32>
    %33 = vector.broadcast %32 : vector<1x32xf32> to vector<16x32xf32>
    %34 = arith.addf %31, %33 : vector<16x32xf32>
    %35 = arith.addf %0, %34 : vector<16x32xf32>
    %c0_29 = arith.constant 0 : index
    %c0_30 = arith.constant 0 : index
    %36 = vector.load %arg7[%c0_29, %c0_30] : memref<1x32xf32, #tpu.memory_space<vmem>>, vector<1x32xf32>
    %c0_31 = arith.constant 0 : index
    %c0_32 = arith.constant 0 : index
    %37 = vector.load %arg8[%c0_31, %c0_32] : memref<1x32xf32, #tpu.memory_space<vmem>>, vector<1x32xf32>
    %cst_33 = arith.constant dense<0.000000e+00> : vector<16xf32>
    %38 = vector.multi_reduction <add>, %35, %cst_33 [1] : vector<16x32xf32> to vector<16xf32>
    %39 = vector.shape_cast %38 : vector<16xf32> to vector<16x1xf32>
    %cst_34 = arith.constant 3.200000e+01 : f32
    %40 = vector.broadcast %cst_34 : f32 to vector<16x1xf32>
    %41 = arith.divf %39, %40 : vector<16x1xf32>
    %42 = vector.broadcast %41 : vector<16x1xf32> to vector<16x32xf32>
    %43 = arith.subf %35, %42 : vector<16x32xf32>
    %44 = arith.mulf %43, %43 : vector<16x32xf32>
    %cst_35 = arith.constant dense<0.000000e+00> : vector<16xf32>
    %45 = vector.multi_reduction <add>, %44, %cst_35 [1] : vector<16x32xf32> to vector<16xf32>
    %46 = vector.shape_cast %45 : vector<16xf32> to vector<16x1xf32>
    %cst_36 = arith.constant 3.200000e+01 : f32
    %47 = vector.broadcast %cst_36 : f32 to vector<16x1xf32>
    %48 = arith.divf %46, %47 : vector<16x1xf32>
    %49 = vector.broadcast %41 : vector<16x1xf32> to vector<16x32xf32>
    %50 = arith.subf %35, %49 : vector<16x32xf32>
    %cst_37 = arith.constant 9.99999974E-6 : f32
    %51 = vector.broadcast %cst_37 : f32 to vector<16x1xf32>
    %52 = arith.addf %48, %51 : vector<16x1xf32>
    %53 = math.rsqrt %52 : vector<16x1xf32>
    %54 = vector.broadcast %53 : vector<16x1xf32> to vector<16x32xf32>
    %55 = arith.mulf %50, %54 : vector<16x32xf32>
    %56 = vector.broadcast %36 : vector<1x32xf32> to vector<16x32xf32>
    %57 = arith.mulf %55, %56 : vector<16x32xf32>
    %58 = vector.broadcast %37 : vector<1x32xf32> to vector<16x32xf32>
    %59 = arith.addf %57, %58 : vector<16x32xf32>
    %c0_38 = arith.constant 0 : index
    %c0_39 = arith.constant 0 : index
    %60 = vector.load %arg9[%c0_38, %c0_39] : memref<32x128xf32, #tpu.memory_space<vmem>>, vector<32x128xf32>
    %cst_40 = arith.constant dense<0.000000e+00> : vector<16x128xf32>
    %61 = tpu.matmul %59, %60, %cst_40 {dimension_numbers = #tpu.dot_dimension_numbers<[1], [0], [0], [1], [0, 0, 1, 1], [], []>} : vector<16x32xf32>, vector<32x128xf32>, vector<16x128xf32> -> vector<16x128xf32>
    %c0_41 = arith.constant 0 : index
    %c0_42 = arith.constant 0 : index
    %62 = vector.load %arg10[%c0_41, %c0_42] : memref<1x128xf32, #tpu.memory_space<vmem>>, vector<1x128xf32>
    %63 = vector.broadcast %62 : vector<1x128xf32> to vector<16x128xf32>
    %64 = arith.addf %61, %63 : vector<16x128xf32>
    %cst_43 = arith.constant 0.000000e+00 : f32
    %65 = vector.broadcast %cst_43 : f32 to vector<16x128xf32>
    %66 = arith.maximumf %64, %65 : vector<16x128xf32>
    %c0_44 = arith.constant 0 : index
    %c0_45 = arith.constant 0 : index
    %67 = vector.load %arg11[%c0_44, %c0_45] : memref<128x32xf32, #tpu.memory_space<vmem>>, vector<128x32xf32>
    %cst_46 = arith.constant dense<0.000000e+00> : vector<16x32xf32>
    %68 = tpu.matmul %66, %67, %cst_46 {dimension_numbers = #tpu.dot_dimension_numbers<[1], [0], [0], [1], [0, 0, 1, 1], [], []>} : vector<16x128xf32>, vector<128x32xf32>, vector<16x32xf32> -> vector<16x32xf32>
    %c0_47 = arith.constant 0 : index
    %c0_48 = arith.constant 0 : index
    %69 = vector.load %arg12[%c0_47, %c0_48] : memref<1x32xf32, #tpu.memory_space<vmem>>, vector<1x32xf32>
    %70 = vector.broadcast %69 : vector<1x32xf32> to vector<16x32xf32>
    %71 = arith.addf %68, %70 : vector<16x32xf32>
    %72 = arith.addf %59, %71 : vector<16x32xf32>
    %c0_49 = arith.constant 0 : index
    %c0_50 = arith.constant 0 : index
    %73 = vector.load %arg13[%c0_49, %c0_50] : memref<1x32xf32, #tpu.memory_space<vmem>>, vector<1x32xf32>
    %c0_51 = arith.constant 0 : index
    %c0_52 = arith.constant 0 : index
    %74 = vector.load %arg14[%c0_51, %c0_52] : memref<1x32xf32, #tpu.memory_space<vmem>>, vector<1x32xf32>
    %cst_53 = arith.constant dense<0.000000e+00> : vector<16xf32>
    %75 = vector.multi_reduction <add>, %72, %cst_53 [1] : vector<16x32xf32> to vector<16xf32>
    %76 = vector.shape_cast %75 : vector<16xf32> to vector<16x1xf32>
    %cst_54 = arith.constant 3.200000e+01 : f32
    %77 = vector.broadcast %cst_54 : f32 to vector<16x1xf32>
    %78 = arith.divf %76, %77 : vector<16x1xf32>
    %79 = vector.broadcast %78 : vector<16x1xf32> to vector<16x32xf32>
    %80 = arith.subf %72, %79 : vector<16x32xf32>
    %81 = arith.mulf %80, %80 : vector<16x32xf32>
    %cst_55 = arith.constant dense<0.000000e+00> : vector<16xf32>
    %82 = vector.multi_reduction <add>, %81, %cst_55 [1] : vector<16x32xf32> to vector<16xf32>
    %83 = vector.shape_cast %82 : vector<16xf32> to vector<16x1xf32>
    %cst_56 = arith.constant 3.200000e+01 : f32
    %84 = vector.broadcast %cst_56 : f32 to vector<16x1xf32>
    %85 = arith.divf %83, %84 : vector<16x1xf32>
    %86 = vector.broadcast %78 : vector<16x1xf32> to vector<16x32xf32>
    %87 = arith.subf %72, %86 : vector<16x32xf32>
    %cst_57 = arith.constant 9.99999974E-6 : f32
    %88 = vector.broadcast %cst_57 : f32 to vector<16x1xf32>
    %89 = arith.addf %85, %88 : vector<16x1xf32>
    %90 = math.rsqrt %89 : vector<16x1xf32>
    %91 = vector.broadcast %90 : vector<16x1xf32> to vector<16x32xf32>
    %92 = arith.mulf %87, %91 : vector<16x32xf32>
    %93 = vector.broadcast %73 : vector<1x32xf32> to vector<16x32xf32>
    %94 = arith.mulf %92, %93 : vector<16x32xf32>
    %95 = vector.broadcast %74 : vector<1x32xf32> to vector<16x32xf32>
    %96 = arith.addf %94, %95 : vector<16x32xf32>
    %c0_58 = arith.constant 0 : index
    %c0_59 = arith.constant 0 : index
    %97 = vector.load %arg19[%c0_58, %c0_59] : memref<16x32xf32, #tpu.memory_space<vmem>>, vector<16x32xf32>
    tpu.vector_store %arg19[%c0_58, %c0_59], %96 {strides = array<i32>} : memref<16x32xf32, #tpu.memory_space<vmem>>, vector<16x32xf32>,
    return
  }
  func.func @transform_0(%arg0: i32) -> (i32, i32) {
    %c0_i32 = arith.constant 0 : i32
    %c0_i32_0 = arith.constant 0 : i32
    %c0_i32_1 = arith.constant 0 : i32
    return %c0_i32, %c0_i32_0 : i32, i32
  }
  func.func @transform_1(%arg0: i32) -> (i32, i32) {
    %c0_i32 = arith.constant 0 : i32
    %c0_i32_0 = arith.constant 0 : i32
    %c0_i32_1 = arith.constant 0 : i32
    return %c0_i32, %c0_i32_0 : i32, i32
  }
  func.func @transform_2(%arg0: i32) -> (i32, i32) {
    %c0_i32 = arith.constant 0 : i32
    %c0_i32_0 = arith.constant 0 : i32
    %c0_i32_1 = arith.constant 0 : i32
    return %c0_i32, %c0_i32_0 : i32, i32
  }
  func.func @transform_3(%arg0: i32) -> (i32, i32) {
    %c0_i32 = arith.constant 0 : i32
    %c0_i32_0 = arith.constant 0 : i32
    %c0_i32_1 = arith.constant 0 : i32
    return %c0_i32, %c0_i32_0 : i32, i32
  }
  func.func @transform_4(%arg0: i32) -> (i32, i32) {
    %c0_i32 = arith.constant 0 : i32
    %c0_i32_0 = arith.constant 0 : i32
    %c0_i32_1 = arith.constant 0 : i32
    return %c0_i32, %c0_i32_0 : i32, i32
  }
  func.func @transform_5(%arg0: i32) -> (i32, i32) {
    %c0_i32 = arith.constant 0 : i32
    %c0_i32_0 = arith.constant 0 : i32
    %c0_i32_1 = arith.constant 0 : i32
    return %c0_i32, %c0_i32_0 : i32, i32
  }
  func.func @transform_6(%arg0: i32) -> (i32, i32) {
    %c0_i32 = arith.constant 0 : i32
    %c0_i32_0 = arith.constant 0 : i32
    %c0_i32_1 = arith.constant 0 : i32
    return %c0_i32, %c0_i32_0 : i32, i32
  }
  func.func @transform_7(%arg0: i32) -> (i32, i32) {
    %c0_i32 = arith.constant 0 : i32
    %c0_i32_0 = arith.constant 0 : i32
    %c0_i32_1 = arith.constant 0 : i32
    return %c0_i32, %c0_i32_0 : i32, i32
  }
  func.func @transform_8(%arg0: i32) -> (i32, i32) {
    %c0_i32 = arith.constant 0 : i32
    %c0_i32_0 = arith.constant 0 : i32
    %c0_i32_1 = arith.constant 0 : i32
    return %c0_i32, %c0_i32_0 : i32, i32
  }
  func.func @transform_9(%arg0: i32) -> (i32, i32) {
    %c0_i32 = arith.constant 0 : i32
    %c0_i32_0 = arith.constant 0 : i32
    %c0_i32_1 = arith.constant 0 : i32
    return %c0_i32, %c0_i32_0 : i32, i32
  }
  func.func @transform_10(%arg0: i32) -> (i32, i32) {
    %c0_i32 = arith.constant 0 : i32
    %c0_i32_0 = arith.constant 0 : i32
    %c0_i32_1 = arith.constant 0 : i32
    return %c0_i32, %c0_i32_0 : i32, i32
  }
  func.func @transform_11(%arg0: i32) -> (i32, i32) {
    %c0_i32 = arith.constant 0 : i32
    %c0_i32_0 = arith.constant 0 : i32
    %c0_i32_1 = arith.constant 0 : i32
    return %c0_i32, %c0_i32_0 : i32, i32
  }
  func.func @transform_12(%arg0: i32) -> (i32, i32) {
    %c0_i32 = arith.constant 0 : i32
    %c0_i32_0 = arith.constant 0 : i32
    %c0_i32_1 = arith.constant 0 : i32
    return %c0_i32, %c0_i32_0 : i32, i32
  }
  func.func @transform_13(%arg0: i32) -> (i32, i32) {
    %c0_i32 = arith.constant 0 : i32
    %c0_i32_0 = arith.constant 0 : i32
    %c0_i32_1 = arith.constant 0 : i32
    return %c0_i32, %c0_i32_0 : i32, i32
  }
  func.func @transform_14(%arg0: i32) -> (i32, i32) {
    %c0_i32 = arith.constant 0 : i32
    %c0_i32_0 = arith.constant 0 : i32
    %c0_i32_1 = arith.constant 0 : i32
    return %c0_i32, %c0_i32_0 : i32, i32
  }
  func.func @transform_15(%arg0: i32) -> (i32, i32) {
    %c0_i32 = arith.constant 0 : i32
    %c0_i32_0 = arith.constant 0 : i32
    %c0_i32_1 = arith.constant 0 : i32
    return %c0_i32, %c0_i32_0 : i32, i32
  }
  func.func @transform_16(%arg0: i32) -> (i32, i32) {
    %c0_i32 = arith.constant 0 : i32
    %c0_i32_0 = arith.constant 0 : i32
    %c0_i32_1 = arith.constant 0 : i32
    return %c0_i32, %c0_i32_0 : i32, i32
  }
  func.func @transform_17(%arg0: i32) -> (i32, i32) {
    %c0_i32 = arith.constant 0 : i32
    %c0_i32_0 = arith.constant 0 : i32
    %c0_i32_1 = arith.constant 0 : i32
    return %c0_i32, %c0_i32_0 : i32, i32
  }
  func.func @transform_18(%arg0: i32) -> (i32, i32) {
    %c0_i32 = arith.constant 0 : i32
    %c0_i32_0 = arith.constant 0 : i32
    %c0_i32_1 = arith.constant 0 : i32
    return %c0_i32, %c0_i32_0 : i32, i32
  }
}

</mosaic_0001>

<llo_original>
// kernel: tpu_custom_call.1
$region0: #{tpu_custom_call.1}
  #allocation0 [shape = 'u32[]', space=smem, size = 0x4, offset = 0x4, fixed_abs, tag = 'smem constant byte address 0x4 - core index']
  #allocation1 [shape = 'u32[72,128]{1,0:T(1,128)}', space=vmem, size = 0x9000, scoped, tag = 'internal scratch']
  %s0 = inlined_call_operand.vmem [shape: f32[16,32], index: 0, kind: input, shape index: {}]
  %s1 = inlined_call_operand.vmem [shape: f32[32,32], index: 1, kind: input, shape index: {}]
  %s2 = inlined_call_operand.vmem [shape: f32[32,32], index: 2, kind: input, shape index: {}]
  %s3 = inlined_call_operand.vmem [shape: f32[32,32], index: 3, kind: input, shape index: {}]
  %s4 = inlined_call_operand.vmem [shape: f32[32,32], index: 4, kind: input, shape index: {}]
  %s5 = inlined_call_operand.vmem [shape: f32[1,32], index: 5, kind: input, shape index: {}]
  %s6 = inlined_call_operand.vmem [shape: f32[1,32], index: 6, kind: input, shape index: {}]
  %s7 = inlined_call_operand.vmem [shape: f32[1,32], index: 7, kind: input, shape index: {}]
  %s8 = inlined_call_operand.vmem [shape: f32[32,128], index: 8, kind: input, shape index: {}]
  %s9 = inlined_call_operand.vmem [shape: f32[1,128], index: 9, kind: input, shape index: {}]
  %s10 = inlined_call_operand.vmem [shape: f32[128,32], index: 10, kind: input, shape index: {}]
  %s11 = inlined_call_operand.vmem [shape: f32[1,32], index: 11, kind: input, shape index: {}]
  %s12 = inlined_call_operand.vmem [shape: f32[1,32], index: 12, kind: input, shape index: {}]
  %s13 = inlined_call_operand.vmem [shape: f32[1,32], index: 13, kind: input, shape index: {}]
  %s14 = inlined_call_operand.vmem [shape: f32[128,16], index: 14, kind: input, shape index: {}]
  %s15 = inlined_call_operand.vmem [shape: f32[128,32], index: 15, kind: input, shape index: {}]
  %s16 = inlined_call_operand.vmem [shape: f32[16,128], index: 16, kind: input, shape index: {}]
  %s17 = inlined_call_operand.vmem [shape: f32[128,128], index: 17, kind: input, shape index: {}]
  %s18 = inlined_call_operand.hbm [shape: f32[16,32], index: 18, kind: output, shape index: {}]
  %s19 = sld [smem:[#allocation0]]
  $region82: #{tpu_custom_call.1} parent=0
    _
  %s21 = ssub.s32 1, %s19
  %s22 = scalar_select 0, %s21, %s19
  $region1: #{tpu_custom_call.1} parent=0
    #allocation2 [shape = 'u8[8192]{0}', space=vmem, size = 0x2000, scoped, tag = 'output window, operand 0, single buffered']
    #allocation3 [shape = 's32[1]{0}', space=sflag, size = 0x4, scoped, tag = 'scoped memory for tpu_custom_call.1']
    %23 = vsyncpa [#allocation3], 0
    // Predicated region
    $region2: #{tpu_custom_call.1} parent=1 // pred_check
      _
    $region3: #{tpu_custom_call.1} parent=1 // pred_check_branch
      %25 = sbr.rel (0) target = $region5
    $region4: #{tpu_custom_call.1} parent=1 // pred_region
      _
    $region5: #{tpu_custom_call.1} parent=1 // pred_fallthru
      _
    // Predicated region
    $region6: #{tpu_custom_call.1} parent=1 // pred_check
      _
    $region7: #{tpu_custom_call.1} parent=1 // pred_check_branch
      %27 = sbr.rel (0) target = $region9
    $region8: #{tpu_custom_call.1} parent=1 // pred_region
      _
    $region9: #{tpu_custom_call.1} parent=1 // pred_fallthru
      _
    // Predicated region
    $region10: #{tpu_custom_call.1} parent=1 // pred_check
      _
    $region11: #{tpu_custom_call.1} parent=1 // pred_check_branch
      %29 = sbr.rel (0) target = $region13
    $region12: #{tpu_custom_call.1} parent=1 // pred_region
      _
    $region13: #{tpu_custom_call.1} parent=1 // pred_fallthru
      _
    // Predicated region
    $region14: #{tpu_custom_call.1} parent=1 // pred_check
      _
    $region15: #{tpu_custom_call.1} parent=1 // pred_check_branch
      %31 = sbr.rel (0) target = $region17
    $region16: #{tpu_custom_call.1} parent=1 // pred_region
      _
    $region17: #{tpu_custom_call.1} parent=1 // pred_fallthru
      _
    // Predicated region
    $region18: #{tpu_custom_call.1} parent=1 // pred_check
      _
    $region19: #{tpu_custom_call.1} parent=1 // pred_check_branch
      %33 = sbr.rel (0) target = $region21
    $region20: #{tpu_custom_call.1} parent=1 // pred_region
      _
    $region21: #{tpu_custom_call.1} parent=1 // pred_fallthru
      _
    // Predicated region
    $region22: #{tpu_custom_call.1} parent=1 // pred_check
      _
    $region23: #{tpu_custom_call.1} parent=1 // pred_check_branch
      %35 = sbr.rel (0) target = $region25
    $region24: #{tpu_custom_call.1} parent=1 // pred_region
      _
    $region25: #{tpu_custom_call.1} parent=1 // pred_fallthru
      _
    // Predicated region
    $region26: #{tpu_custom_call.1} parent=1 // pred_check
      _
    $region27: #{tpu_custom_call.1} parent=1 // pred_check_branch
      %37 = sbr.rel (0) target = $region29
    $region28: #{tpu_custom_call.1} parent=1 // pred_region
      _
    $region29: #{tpu_custom_call.1} parent=1 // pred_fallthru
      _
    // Predicated region
    $region30: #{tpu_custom_call.1} parent=1 // pred_check
      _
    $region31: #{tpu_custom_call.1} parent=1 // pred_check_branch
      %39 = sbr.rel (0) target = $region33
    $region32: #{tpu_custom_call.1} parent=1 // pred_region
      _
    $region33: #{tpu_custom_call.1} parent=1 // pred_fallthru
      _
    // Predicated region
    $region34: #{tpu_custom_call.1} parent=1 // pred_check
      _
    $region35: #{tpu_custom_call.1} parent=1 // pred_check_branch
      %41 = sbr.rel (0) target = $region37
    $region36: #{tpu_custom_call.1} parent=1 // pred_region
      _
    $region37: #{tpu_custom_call.1} parent=1 // pred_fallthru
      _
    // Predicated region
    $region38: #{tpu_custom_call.1} parent=1 // pred_check
      _
    $region39: #{tpu_custom_call.1} parent=1 // pred_check_branch
      %43 = sbr.rel (0) target = $region41
    $region40: #{tpu_custom_call.1} parent=1 // pred_region
      _
    $region41: #{tpu_custom_call.1} parent=1 // pred_fallthru
      _
    // Predicated region
    $region42: #{tpu_custom_call.1} parent=1 // pred_check
      _
    $region43: #{tpu_custom_call.1} parent=1 // pred_check_branch
      %45 = sbr.rel (0) target = $region45
    $region44: #{tpu_custom_call.1} parent=1 // pred_region
      _
    $region45: #{tpu_custom_call.1} parent=1 // pred_fallthru
      _
    // Predicated region
    $region46: #{tpu_custom_call.1} parent=1 // pred_check
      _
    $region47: #{tpu_custom_call.1} parent=1 // pred_check_branch
      %47 = sbr.rel (0) target = $region49
    $region48: #{tpu_custom_call.1} parent=1 // pred_region
      _
    $region49: #{tpu_custom_call.1} parent=1 // pred_fallthru
      _
    // Predicated region
    $region50: #{tpu_custom_call.1} parent=1 // pred_check
      _
    $region51: #{tpu_custom_call.1} parent=1 // pred_check_branch
      %49 = sbr.rel (0) target = $region53
    $region52: #{tpu_custom_call.1} parent=1 // pred_region
      _
    $region53: #{tpu_custom_call.1} parent=1 // pred_fallthru
      _
    // Predicated region
    $region54: #{tpu_custom_call.1} parent=1 // pred_check
      _
    $region55: #{tpu_custom_call.1} parent=1 // pred_check_branch
      %51 = sbr.rel (0) target = $region57
    $region56: #{tpu_custom_call.1} parent=1 // pred_region
      _
    $region57: #{tpu_custom_call.1} parent=1 // pred_fallthru
      _
    // Predicated region
    $region58: #{tpu_custom_call.1} parent=1 // pred_check
      _
    $region59: #{tpu_custom_call.1} parent=1 // pred_check_branch
      %53 = sbr.rel (0) target = $region61
    $region60: #{tpu_custom_call.1} parent=1 // pred_region
      _
    $region61: #{tpu_custom_call.1} parent=1 // pred_fallthru
      _
    // Predicated region
    $region62: #{tpu_custom_call.1} parent=1 // pred_check
      _
    $region63: #{tpu_custom_call.1} parent=1 // pred_check_branch
      %55 = sbr.rel (0) target = $region65
    $region64: #{tpu_custom_call.1} parent=1 // pred_region
      _
    $region65: #{tpu_custom_call.1} parent=1 // pred_fallthru
      _
    // Predicated region
    $region66: #{tpu_custom_call.1} parent=1 // pred_check
      _
    $region67: #{tpu_custom_call.1} parent=1 // pred_check_branch
      %57 = sbr.rel (0) target = $region69
    $region68: #{tpu_custom_call.1} parent=1 // pred_region
      _
    $region69: #{tpu_custom_call.1} parent=1 // pred_fallthru
      _
    // Predicated region
    $region70: #{tpu_custom_call.1} parent=1 // pred_check
      _
    $region71: #{tpu_custom_call.1} parent=1 // pred_check_branch
      %59 = sbr.rel (0) target = $region73
    $region72: #{tpu_custom_call.1} parent=1 // pred_region
      _
    $region73: #{tpu_custom_call.1} parent=1 // pred_fallthru
      _
    %v60 = vld [vmem:[%s0] sm:$0xff]
    %v61 = vld [vmem:[%s0 + $0x8] sm:$0xff]
    %v62 = vld [vmem:[%s1] sm:$0xff]
    %v63 = vld [vmem:[%s1 + $0x8] sm:$0xff]
    %v64 = vld [vmem:[%s1 + $0x10] sm:$0xff]
    %v65 = vld [vmem:[%s1 + $0x18] sm:$0xff]
    %vm66 = vcmask 261120
    %v68 = vsel %vm66, %v60, 0
    %v71 = vsel %vm66, %v61, 0
    %73 = vmatpush.msra.mxu0 0.0
    %74 = vmatpush.msra.mxu0 0.0
    %75 = vmatpush.msra.mxu0 0.0
    %76 = vmatpush.msra.mxu0 0.0
    %77 = vmatpush.msra.mxu0 0.0
    %78 = vmatpush.msra.mxu0 0.0
    %79 = vmatpush.msra.mxu0 0.0
    %80 = vmatpush.msra.mxu0 0.0
    %81 = vmatpush.msra.mxu0 0.0
    %82 = vmatpush.msra.mxu0 0.0
    %83 = vmatpush.msra.mxu0 0.0
    %84 = vmatpush.msra.mxu0 0.0
    %85 = vmatpush.msra.mxu0 %v65
    %86 = vmatpush.msra.mxu0 %v64
    %87 = vmatpush.msra.mxu0 %v63
    %88 = vmatpush.msra.mxu0 %v62
    %89 = vmatmul.f32.gmra.mxu0 %v68
    %v90 = vpop.f32.mrf.mxu0
    %v91 = vadd.f32 0.0, %v90
    %92 = vmatmul.f32.gmra.mxu0 %v71
    %v93 = vpop.f32.mrf.mxu0
    %v94 = vadd.f32 0.0, %v93
    %95 = vdwg.mxu0
    %v96 = vld [vmem:[%s2] sm:$0xff]
    %v97 = vld [vmem:[%s2 + $0x8] sm:$0xff]
    %v98 = vld [vmem:[%s2 + $0x10] sm:$0xff]
    %v99 = vld [vmem:[%s2 + $0x18] sm:$0xff]
    %100 = vmatpush.msra.mxu0 0.0
    %101 = vmatpush.msra.mxu0 0.0
    %102 = vmatpush.msra.mxu0 0.0
    %103 = vmatpush.msra.mxu0 0.0
    %104 = vmatpush.msra.mxu0 0.0
    %105 = vmatpush.msra.mxu0 0.0
    %106 = vmatpush.msra.mxu0 0.0
    %107 = vmatpush.msra.mxu0 0.0
    %108 = vmatpush.msra.mxu0 0.0
    %109 = vmatpush.msra.mxu0 0.0
    %110 = vmatpush.msra.mxu0 0.0
    %111 = vmatpush.msra.mxu0 0.0
    %112 = vmatpush.msra.mxu0 %v99
    %113 = vmatpush.msra.mxu0 %v98
    %114 = vmatpush.msra.mxu0 %v97
    %115 = vmatpush.msra.mxu0 %v96
    %116 = vmatmul.f32.gmra.mxu0 %v68
    %v117 = vpop.f32.mrf.mxu0
    %v118 = vadd.f32 0.0, %v117
    %119 = vmatmul.f32.gmra.mxu0 %v71
    %v120 = vpop.f32.mrf.mxu0
    %v121 = vadd.f32 0.0, %v120
    %122 = vdwg.mxu0
    %v123 = vld [vmem:[%s3] sm:$0xff]
    %v124 = vld [vmem:[%s3 + $0x8] sm:$0xff]
    %v125 = vld [vmem:[%s3 + $0x10] sm:$0xff]
    %v126 = vld [vmem:[%s3 + $0x18] sm:$0xff]
    %127 = vmatpush.msra.mxu0 0.0
    %128 = vmatpush.msra.mxu0 0.0
    %129 = vmatpush.msra.mxu0 0.0
    %130 = vmatpush.msra.mxu0 0.0
    %131 = vmatpush.msra.mxu0 0.0
    %132 = vmatpush.msra.mxu0 0.0
    %133 = vmatpush.msra.mxu0 0.0
    %134 = vmatpush.msra.mxu0 0.0
    %135 = vmatpush.msra.mxu0 0.0
    %136 = vmatpush.msra.mxu0 0.0
    %137 = vmatpush.msra.mxu0 0.0
    %138 = vmatpush.msra.mxu0 0.0
    %139 = vmatpush.msra.mxu0 %v126
    %140 = vmatpush.msra.mxu0 %v125
    %141 = vmatpush.msra.mxu0 %v124
    %142 = vmatpush.msra.mxu0 %v123
    %143 = vmatmul.f32.gmra.mxu0 %v68
    %v144 = vpop.f32.mrf.mxu0
    %v145 = vadd.f32 0.0, %v144
    %146 = vmatmul.f32.gmra.mxu0 %v71
    %v147 = vpop.f32.mrf.mxu0
    %v148 = vadd.f32 0.0, %v147
    %149 = vdwg.mxu0
    %v150 = vld [vmem:[%s14] sm:$0xff]
    %v151 = vld [vmem:[%s14 + $0x8] sm:$0xff]
    %v152 = vld [vmem:[%s14 + $0x10] sm:$0xff]
    %v153 = vld [vmem:[%s14 + $0x18] sm:$0xff]
    %v154 = vld [vmem:[%s14 + $0x20] sm:$0xff]
    %v155 = vld [vmem:[%s14 + $0x28] sm:$0xff]
    %v156 = vld [vmem:[%s14 + $0x30] sm:$0xff]
    %v157 = vld [vmem:[%s14 + $0x38] sm:$0xff]
    %v158 = vld [vmem:[%s14 + $0x40] sm:$0xff]
    %v159 = vld [vmem:[%s14 + $0x48] sm:$0xff]
    %v160 = vld [vmem:[%s14 + $0x50] sm:$0xff]
    %v161 = vld [vmem:[%s14 + $0x58] sm:$0xff]
    %v162 = vld [vmem:[%s14 + $0x60] sm:$0xff]
    %v163 = vld [vmem:[%s14 + $0x68] sm:$0xff]
    %v164 = vld [vmem:[%s14 + $0x70] sm:$0xff]
    %v165 = vld [vmem:[%s14 + $0x78] sm:$0xff]
    %v166 = vld [vmem:[%s15] sm:$0xff]
    %v167 = vld [vmem:[%s15 + $0x8] sm:$0xff]
    %v168 = vld [vmem:[%s15 + $0x10] sm:$0xff]
    %v169 = vld [vmem:[%s15 + $0x18] sm:$0xff]
    %v170 = vld [vmem:[%s15 + $0x20] sm:$0xff]
    %v171 = vld [vmem:[%s15 + $0x28] sm:$0xff]
    %v172 = vld [vmem:[%s15 + $0x30] sm:$0xff]
    %v173 = vld [vmem:[%s15 + $0x38] sm:$0xff]
    %v174 = vld [vmem:[%s15 + $0x40] sm:$0xff]
    %v175 = vld [vmem:[%s15 + $0x48] sm:$0xff]
    %v176 = vld [vmem:[%s15 + $0x50] sm:$0xff]
    %v177 = vld [vmem:[%s15 + $0x58] sm:$0xff]
    %v178 = vld [vmem:[%s15 + $0x60] sm:$0xff]
    %v179 = vld [vmem:[%s15 + $0x68] sm:$0xff]
    %v180 = vld [vmem:[%s15 + $0x70] sm:$0xff]
    %v181 = vld [vmem:[%s15 + $0x78] sm:$0xff]
    %vm182 = vcmask 130048
    %v184 = vsel %vm182, %v150, 0
    %v187 = vsel %vm182, %v151, 0
    %v190 = vsel %vm182, %v152, 0
    %v193 = vsel %vm182, %v153, 0
    %v196 = vsel %vm182, %v154, 0
    %v199 = vsel %vm182, %v155, 0
    %v202 = vsel %vm182, %v156, 0
    %v205 = vsel %vm182, %v157, 0
    %v208 = vsel %vm182, %v158, 0
    %v211 = vsel %vm182, %v159, 0
    %v214 = vsel %vm182, %v160, 0
    %v217 = vsel %vm182, %v161, 0
    %v220 = vsel %vm182, %v162, 0
    %v223 = vsel %vm182, %v163, 0
    %v226 = vsel %vm182, %v164, 0
    %v229 = vsel %vm182, %v165, 0
    %231 = vmatpush.msra.mxu0 0.0
    %232 = vmatpush.msra.mxu0 0.0
    %233 = vmatpush.msra.mxu0 0.0
    %234 = vmatpush.msra.mxu0 0.0
    %235 = vmatpush.msra.mxu0 0.0
    %236 = vmatpush.msra.mxu0 0.0
    %237 = vmatpush.msra.mxu0 0.0
    %238 = vmatpush.msra.mxu0 0.0
    %239 = vmatpush.msra.mxu0 0.0
    %240 = vmatpush.msra.mxu0 0.0
    %241 = vmatpush.msra.mxu0 0.0
    %242 = vmatpush.msra.mxu0 0.0
    %243 = vmatpush.msra.mxu0 0.0
    %244 = vmatpush.msra.mxu0 0.0
    %245 = vmatpush.msra.mxu0 %v121
    %246 = vmatpush.msra.mxu0 %v118
    %247 = vmatmul.f32.gmra.mxu0 %v184
    %v248 = vpop.f32.mrf.mxu0
    %v249 = vadd.f32 0.0, %v248
    %250 = vmatmul.f32.gmra.mxu0 %v187
    %v251 = vpop.f32.mrf.mxu0
    %v252 = vadd.f32 0.0, %v251
    %253 = vmatmul.f32.gmra.mxu0 %v190
    %v254 = vpop.f32.mrf.mxu0
    %v255 = vadd.f32 0.0, %v254
    %256 = vmatmul.f32.gmra.mxu0 %v193
    %v257 = vpop.f32.mrf.mxu0
    %v258 = vadd.f32 0.0, %v257
    %259 = vmatmul.f32.gmra.mxu0 %v196
    %v260 = vpop.f32.mrf.mxu0
    %v261 = vadd.f32 0.0, %v260
    %262 = vmatmul.f32.gmra.mxu0 %v199
    %v263 = vpop.f32.mrf.mxu0
    %v264 = vadd.f32 0.0, %v263
    %265 = vmatmul.f32.gmra.mxu0 %v202
    %v266 = vpop.f32.mrf.mxu0
    %v267 = vadd.f32 0.0, %v266
    %268 = vmatmul.f32.gmra.mxu0 %v205
    %v269 = vpop.f32.mrf.mxu0
    %v270 = vadd.f32 0.0, %v269
    %271 = vmatmul.f32.gmra.mxu0 %v208
    %v272 = vpop.f32.mrf.mxu0
    %v273 = vadd.f32 0.0, %v272
    %274 = vmatmul.f32.gmra.mxu0 %v211
    %v275 = vpop.f32.mrf.mxu0
    %v276 = vadd.f32 0.0, %v275
    %277 = vmatmul.f32.gmra.mxu0 %v214
    %v278 = vpop.f32.mrf.mxu0
    %v279 = vadd.f32 0.0, %v278
    %280 = vmatmul.f32.gmra.mxu0 %v217
    %v281 = vpop.f32.mrf.mxu0
    %v282 = vadd.f32 0.0, %v281
    %283 = vmatmul.f32.gmra.mxu0 %v220
    %v284 = vpop.f32.mrf.mxu0
    %v285 = vadd.f32 0.0, %v284
    %286 = vmatmul.f32.gmra.mxu0 %v223
    %v287 = vpop.f32.mrf.mxu0
    %v288 = vadd.f32 0.0, %v287
    %289 = vmatmul.f32.gmra.mxu0 %v226
    %v290 = vpop.f32.mrf.mxu0
    %v291 = vadd.f32 0.0, %v290
    %292 = vmatmul.f32.gmra.mxu0 %v229
    %v293 = vpop.f32.mrf.mxu0
    %v294 = vadd.f32 0.0, %v293
    %295 = vdwg.mxu0
    %v296 = vmul.f32 %v249, %v166
    %v297 = vmul.f32 %v252, %v167
    %v298 = vmul.f32 %v255, %v168
    %v299 = vmul.f32 %v258, %v169
    %v300 = vmul.f32 %v261, %v170
    %v301 = vmul.f32 %v264, %v171
    %v302 = vmul.f32 %v267, %v172
    %v303 = vmul.f32 %v270, %v173
    %v304 = vmul.f32 %v273, %v174
    %v305 = vmul.f32 %v276, %v175
    %v306 = vmul.f32 %v279, %v176
    %v307 = vmul.f32 %v282, %v177
    %v308 = vmul.f32 %v285, %v178
    %v309 = vmul.f32 %v288, %v179
    %v310 = vmul.f32 %v291, %v180
    %v311 = vmul.f32 %v294, %v181
    %312 = vmatpush.msra.mxu0 0.0
    %313 = vmatpush.msra.mxu0 0.0
    %314 = vmatpush.msra.mxu0 0.0
    %315 = vmatpush.msra.mxu0 0.0
    %316 = vmatpush.msra.mxu0 0.0
    %317 = vmatpush.msra.mxu0 0.0
    %318 = vmatpush.msra.mxu0 0.0
    %319 = vmatpush.msra.mxu0 0.0
    %320 = vmatpush.msra.mxu0 0.0
    %321 = vmatpush.msra.mxu0 0.0
    %322 = vmatpush.msra.mxu0 0.0
    %323 = vmatpush.msra.mxu0 0.0
    %324 = vmatpush.msra.mxu0 0.0
    %325 = vmatpush.msra.mxu0 0.0
    %326 = vmatpush.msra.mxu0 %v148
    %327 = vmatpush.msra.mxu0 %v145
    %328 = vmatmul.f32.gmra.mxu0 %v184
    %v329 = vpop.f32.mrf.mxu0
    %v330 = vadd.f32 0.0, %v329
    %331 = vmatmul.f32.gmra.mxu0 %v187
    %v332 = vpop.f32.mrf.mxu0
    %v333 = vadd.f32 0.0, %v332
    %334 = vmatmul.f32.gmra.mxu0 %v190
    %v335 = vpop.f32.mrf.mxu0
    %v336 = vadd.f32 0.0, %v335
    %337 = vmatmul.f32.gmra.mxu0 %v193
    %v338 = vpop.f32.mrf.mxu0
    %v339 = vadd.f32 0.0, %v338
    %340 = vmatmul.f32.gmra.mxu0 %v196
    %v341 = vpop.f32.mrf.mxu0
    %v342 = vadd.f32 0.0, %v341
    %343 = vmatmul.f32.gmra.mxu0 %v199
    %v344 = vpop.f32.mrf.mxu0
    %v345 = vadd.f32 0.0, %v344
    %346 = vmatmul.f32.gmra.mxu0 %v202
    %v347 = vpop.f32.mrf.mxu0
    %v348 = vadd.f32 0.0, %v347
    %349 = vmatmul.f32.gmra.mxu0 %v205
    %v350 = vpop.f32.mrf.mxu0
    %v351 = vadd.f32 0.0, %v350
    %352 = vmatmul.f32.gmra.mxu0 %v208
    %v353 = vpop.f32.mrf.mxu0
    %v354 = vadd.f32 0.0, %v353
    %355 = vmatmul.f32.gmra.mxu0 %v211
    %v356 = vpop.f32.mrf.mxu0
    %v357 = vadd.f32 0.0, %v356
    %358 = vmatmul.f32.gmra.mxu0 %v214
    %v359 = vpop.f32.mrf.mxu0
    %v360 = vadd.f32 0.0, %v359
    %361 = vmatmul.f32.gmra.mxu0 %v217
    %v362 = vpop.f32.mrf.mxu0
    %v363 = vadd.f32 0.0, %v362
    %364 = vmatmul.f32.gmra.mxu0 %v220
    %v365 = vpop.f32.mrf.mxu0
    %v366 = vadd.f32 0.0, %v365
    %367 = vmatmul.f32.gmra.mxu0 %v223
    %v368 = vpop.f32.mrf.mxu0
    %v369 = vadd.f32 0.0, %v368
    %370 = vmatmul.f32.gmra.mxu0 %v226
    %v371 = vpop.f32.mrf.mxu0
    %v372 = vadd.f32 0.0, %v371
    %373 = vmatmul.f32.gmra.mxu0 %v229
    %v374 = vpop.f32.mrf.mxu0
    %v375 = vadd.f32 0.0, %v374
    %376 = vdwg.mxu0
    %v377 = vmul.f32 %v330, %v166
    %v378 = vmul.f32 %v333, %v167
    %v379 = vmul.f32 %v336, %v168
    %v380 = vmul.f32 %v339, %v169
    %v381 = vmul.f32 %v342, %v170
    %v382 = vmul.f32 %v345, %v171
    %v383 = vmul.f32 %v348, %v172
    %v384 = vmul.f32 %v351, %v173
    %v385 = vmul.f32 %v354, %v174
    %v386 = vmul.f32 %v357, %v175
    %v387 = vmul.f32 %v360, %v176
    %v388 = vmul.f32 %v363, %v177
    %v389 = vmul.f32 %v366, %v178
    %v390 = vmul.f32 %v369, %v179
    %v391 = vmul.f32 %v372, %v180
    %v392 = vmul.f32 %v375, %v181
    %v394 = vsel %vm66, %v91, 0
    %v397 = vsel %vm66, %v94, 0
    %v400 = vsel %vm66, %v296, 0
    %v403 = vsel %vm66, %v297, 0
    %v406 = vsel %vm66, %v298, 0
    %v409 = vsel %vm66, %v299, 0
    %v412 = vsel %vm66, %v300, 0
    %v415 = vsel %vm66, %v301, 0
    %v418 = vsel %vm66, %v302, 0
    %v421 = vsel %vm66, %v303, 0
    %v424 = vsel %vm66, %v304, 0
    %v427 = vsel %vm66, %v305, 0
    %v430 = vsel %vm66, %v306, 0
    %v433 = vsel %vm66, %v307, 0
    %v436 = vsel %vm66, %v308, 0
    %v439 = vsel %vm66, %v309, 0
    %v442 = vsel %vm66, %v310, 0
    %v445 = vsel %vm66, %v311, 0
    %447 = vmatpush.xpose.msra.mxu0 %v445
    %448 = vmatpush.xpose.msra.mxu0 %v442
    %449 = vmatpush.xpose.msra.mxu0 %v439
    %450 = vmatpush.xpose.msra.mxu0 %v436
    %451 = vmatpush.xpose.msra.mxu0 %v433
    %452 = vmatpush.xpose.msra.mxu0 %v430
    %453 = vmatpush.xpose.msra.mxu0 %v427
    %454 = vmatpush.xpose.msra.mxu0 %v424
    %455 = vmatpush.xpose.msra.mxu0 %v421
    %456 = vmatpush.xpose.msra.mxu0 %v418
    %457 = vmatpush.xpose.msra.mxu0 %v415
    %458 = vmatpush.xpose.msra.mxu0 %v412
    %459 = vmatpush.xpose.msra.mxu0 %v409
    %460 = vmatpush.xpose.msra.mxu0 %v406
    %461 = vmatpush.xpose.msra.mxu0 %v403
    %462 = vmatpush.xpose.msra.mxu0 %v400
    %463 = vmatmul.f32.gmra.mxu0 %v394
    %v464 = vpop.f32.mrf.mxu0
    %v465 = vadd.f32 0.0, %v464
    %466 = vmatmul.f32.gmra.mxu0 %v397
    %v467 = vpop.f32.mrf.mxu0
    %v468 = vadd.f32 0.0, %v467
    %469 = vdwg.mxu0
    %v470 = vld [vmem:[%s16] sm:$0xff]
    %v471 = vld [vmem:[%s16 + $0x8] sm:$0xff]
    %472 = vmax.xlane.f32.xlu0 %v465
    %v473 = vpop.xlane.xlu0 %472
    %474 = vmax.xlane.f32.xlu0 %v468
    %v475 = vpop.xlane.xlu0 %474
    %v476 = vsub.f32 %v465, %v473
    %v477 = vsub.f32 %v468, %v475
    %v478 = vmul.f32 %v476, 1.442695
    %v479 = vpow.pop %v478
    %v480 = vmul.f32 %v477, 1.442695
    %v481 = vpow.pop %v480
    %v482 = vmul.f32 %v479, %v470
    %v483 = vmul.f32 %v481, %v471
    %v484 = vld [vmem:[%s17] sm:$0xff]
    %v485 = vld [vmem:[%s17 + $0x8] sm:$0xff]
    %v486 = vld [vmem:[%s17 + $0x10] sm:$0xff]
    %v487 = vld [vmem:[%s17 + $0x18] sm:$0xff]
    %v488 = vld [vmem:[%s17 + $0x20] sm:$0xff]
    %v489 = vld [vmem:[%s17 + $0x28] sm:$0xff]
    %v490 = vld [vmem:[%s17 + $0x30] sm:$0xff]
    %v491 = vld [vmem:[%s17 + $0x38] sm:$0xff]
    %v492 = vld [vmem:[%s17 + $0x40] sm:$0xff]
    %v493 = vld [vmem:[%s17 + $0x48] sm:$0xff]
    %v494 = vld [vmem:[%s17 + $0x50] sm:$0xff]
    %v495 = vld [vmem:[%s17 + $0x58] sm:$0xff]
    %v496 = vld [vmem:[%s17 + $0x60] sm:$0xff]
    %v497 = vld [vmem:[%s17 + $0x68] sm:$0xff]
    %v498 = vld [vmem:[%s17 + $0x70] sm:$0xff]
    %v499 = vld [vmem:[%s17 + $0x78] sm:$0xff]
    %v500 = vsub.f32 1.0, %v470
    %v501 = vsub.f32 1.0, %v471
    %502 = vmatpush.msra.mxu0 %v499
    %503 = vmatpush.msra.mxu0 %v498
    %504 = vmatpush.msra.mxu0 %v497
    %505 = vmatpush.msra.mxu0 %v496
    %506 = vmatpush.msra.mxu0 %v495
    %507 = vmatpush.msra.mxu0 %v494
    %508 = vmatpush.msra.mxu0 %v493
    %509 = vmatpush.msra.mxu0 %v492
    %510 = vmatpush.msra.mxu0 %v491
    %511 = vmatpush.msra.mxu0 %v490
    %512 = vmatpush.msra.mxu0 %v489
    %513 = vmatpush.msra.mxu0 %v488
    %514 = vmatpush.msra.mxu0 %v487
    %515 = vmatpush.msra.mxu0 %v486
    %516 = vmatpush.msra.mxu0 %v485
    %517 = vmatpush.msra.mxu0 %v484
    %518 = vmatmul.f32.gmra.mxu0 %v482
    %v519 = vpop.f32.mrf.mxu0
    %v520 = vadd.f32 %v500, %v519
    %521 = vmatmul.f32.gmra.mxu0 %v483
    %v522 = vpop.f32.mrf.mxu0
    %v523 = vadd.f32 %v501, %v522
    %524 = vdwg.mxu0
    %v525 = vrcp.pop %v520
    %v526 = vmul.f32 %v520, %v525
    %v527 = vsub.f32 1.0, %v526
    %v528 = vmul.f32 %v525, %v527
    %v529 = vadd.f32 %v525, %v528
    %vm530 = vweird.f32 %v520
    %vm531 = vweird.f32 %v525
    %vm532 = vmor %vm530, %vm531
    %v533 = vsel %vm532, %v525, %v529
    %v534 = vand.u32 2147483647, %v520
    %vm535 = vcmp.eq.f32.partialorder %v534, 8.507059e+37
    %v536 = vand.u32 %v520, 2147483648
    %v537 = vor.u32 1.1754944e-38, %v536
    %v538 = vsel %vm535, %v537, %v533
    %v539 = vrcp.pop %v523
    %v540 = vmul.f32 %v523, %v539
    %v541 = vsub.f32 1.0, %v540
    %v542 = vmul.f32 %v539, %v541
    %v543 = vadd.f32 %v539, %v542
    %vm544 = vweird.f32 %v523
    %vm545 = vweird.f32 %v539
    %vm546 = vmor %vm544, %vm545
    %v547 = vsel %vm546, %v539, %v543
    %v548 = vand.u32 2147483647, %v523
    %vm549 = vcmp.eq.f32.partialorder %v548, 8.507059e+37
    %v550 = vand.u32 %v523, 2147483648
    %v551 = vor.u32 1.1754944e-38, %v550
    %v552 = vsel %vm549, %v551, %v547
    %v553 = vmul.f32 %v482, %v538
    %v554 = vmul.f32 %v483, %v552
    %555 = vmatpush.msra.mxu0 %v392
    %556 = vmatpush.msra.mxu0 %v391
    %557 = vmatpush.msra.mxu0 %v390
    %558 = vmatpush.msra.mxu0 %v389
    %559 = vmatpush.msra.mxu0 %v388
    %560 = vmatpush.msra.mxu0 %v387
    %561 = vmatpush.msra.mxu0 %v386
    %562 = vmatpush.msra.mxu0 %v385
    %563 = vmatpush.msra.mxu0 %v384
    %564 = vmatpush.msra.mxu0 %v383
    %565 = vmatpush.msra.mxu0 %v382
    %566 = vmatpush.msra.mxu0 %v381
    %567 = vmatpush.msra.mxu0 %v380
    %568 = vmatpush.msra.mxu0 %v379
    %569 = vmatpush.msra.mxu0 %v378
    %570 = vmatpush.msra.mxu0 %v377
    %571 = vmatmul.f32.gmra.mxu0 %v553
    %v572 = vpop.f32.mrf.mxu0
    %v573 = vadd.f32 0.0, %v572
    %574 = vmatmul.f32.gmra.mxu0 %v554
    %v575 = vpop.f32.mrf.mxu0
    %v576 = vadd.f32 0.0, %v575
    %577 = vdwg.mxu0
    %v578 = vld [vmem:[%s4] sm:$0xff]
    %v579 = vld [vmem:[%s4 + $0x8] sm:$0xff]
    %v580 = vld [vmem:[%s4 + $0x10] sm:$0xff]
    %v581 = vld [vmem:[%s4 + $0x18] sm:$0xff]
    %v582 = vld [vmem:[%s5] sm:$0x1]
    %v584 = vperm.slane %v582, 0
    %v587 = vsel %vm66, %v573, 0
    %v590 = vsel %vm66, %v576, 0
    %592 = vmatpush.msra.mxu0 0.0
    %593 = vmatpush.msra.mxu0 0.0
    %594 = vmatpush.msra.mxu0 0.0
    %595 = vmatpush.msra.mxu0 0.0
    %596 = vmatpush.msra.mxu0 0.0
    %597 = vmatpush.msra.mxu0 0.0
    %598 = vmatpush.msra.mxu0 0.0
    %599 = vmatpush.msra.mxu0 0.0
    %600 = vmatpush.msra.mxu0 0.0
    %601 = vmatpush.msra.mxu0 0.0
    %602 = vmatpush.msra.mxu0 0.0
    %603 = vmatpush.msra.mxu0 0.0
    %604 = vmatpush.msra.mxu0 %v581
    %605 = vmatpush.msra.mxu0 %v580
    %606 = vmatpush.msra.mxu0 %v579
    %607 = vmatpush.msra.mxu0 %v578
    %608 = vmatmul.f32.gmra.mxu0 %v587
    %v609 = vpop.f32.mrf.mxu0
    %v610 = vadd.f32 %v584, %v609
    %611 = vmatmul.f32.gmra.mxu0 %v590
    %v612 = vpop.f32.mrf.mxu0
    %v613 = vadd.f32 %v584, %v612
    %614 = vdwg.mxu0
    %v615 = vadd.f32 %v60, %v610
    %v616 = vadd.f32 %v61, %v613
    %v617 = vld [vmem:[%s6] sm:$0x1]
    %v618 = vld [vmem:[%s7] sm:$0x1]
    %v619 = vsel %vm66, %v615, 0.0
    %620 = vadd.xlane.f32.xlu0 %v619
    %v621 = vpop.xlane.xlu0 %620
    %v622 = vsel %vm66, %v616, 0.0
    %623 = vadd.xlane.f32.xlu0 %v622
    %v624 = vpop.xlane.xlu0 %623
    %v625 = vrcp.pop 32.0
    %v626 = vmul.f32 32.0, %v625
    %v627 = vsub.f32 1.0, %v626
    %v628 = vmul.f32 %v625, %v627
    %v629 = vadd.f32 %v625, %v628
    %vm630 = vweird.f32 %v625
    %v631 = vsel %vm630, %v625, %v629
    %v632 = vmul.f32 %v621, %v631
    %v633 = vmul.f32 %v624, %v631
    %v634 = vsub.f32 %v615, %v632
    %v635 = vsub.f32 %v616, %v633
    %v636 = vmul.f32 %v634, %v634
    %v637 = vmul.f32 %v635, %v635
    %v638 = vsel %vm66, %v636, 0.0
    %639 = vadd.xlane.f32.xlu0 %v638
    %v640 = vpop.xlane.xlu0 %639
    %v641 = vsel %vm66, %v637, 0.0
    %642 = vadd.xlane.f32.xlu0 %v641
    %v643 = vpop.xlane.xlu0 %642
    %v644 = vmul.f32 %v640, %v631
    %v645 = vmul.f32 %v643, %v631
    %v646 = vadd.f32 %v644, 1e-05
    %v647 = vadd.f32 %v645, 1e-05
    %v648 = vrsqrt.pop %v646
    %v649 = vmul.f32 %v648, %v646
    %v650 = vmul.f32 %v649, %v648
    %v651 = vmul.f32 0.5, %v650
    %v652 = vsub.f32 1.5, %v651
    %v653 = vmul.f32 %v648, %v652
    %vm654 = vweird.f32 %v646
    %vm655 = vweird.f32 %v648
    %vm656 = vmor %vm654, %vm655
    %v657 = vsel %vm656, %v648, %v653
    %v658 = vrsqrt.pop %v647
    %v659 = vmul.f32 %v658, %v647
    %v660 = vmul.f32 %v659, %v658
    %v661 = vmul.f32 0.5, %v660
    %v662 = vsub.f32 1.5, %v661
    %v663 = vmul.f32 %v658, %v662
    %vm664 = vweird.f32 %v647
    %vm665 = vweird.f32 %v658
    %vm666 = vmor %vm664, %vm665
    %v667 = vsel %vm666, %v658, %v663
    %v668 = vmul.f32 %v634, %v657
    %v669 = vmul.f32 %v635, %v667
    %v671 = vperm.slane %v617, 0
    %v673 = vmul.f32 %v668, %v671
    %v674 = vmul.f32 %v669, %v671
    %v676 = vperm.slane %v618, 0
    %v678 = vadd.f32 %v673, %v676
    %v679 = vadd.f32 %v674, %v676
    %v680 = vld [vmem:[%s8] sm:$0xff]
    %v681 = vld [vmem:[%s8 + $0x8] sm:$0xff]
    %v682 = vld [vmem:[%s8 + $0x10] sm:$0xff]
    %v683 = vld [vmem:[%s8 + $0x18] sm:$0xff]
    %v684 = vld [vmem:[%s9] sm:$0x1]
    %v686 = vperm.slane %v684, 0
    %v689 = vsel %vm66, %v678, 0
    %v692 = vsel %vm66, %v679, 0
    %694 = vmatpush.msra.mxu0 0.0
    %695 = vmatpush.msra.mxu0 0.0
    %696 = vmatpush.msra.mxu0 0.0
    %697 = vmatpush.msra.mxu0 0.0
    %698 = vmatpush.msra.mxu0 0.0
    %699 = vmatpush.msra.mxu0 0.0
    %700 = vmatpush.msra.mxu0 0.0
    %701 = vmatpush.msra.mxu0 0.0
    %702 = vmatpush.msra.mxu0 0.0
    %703 = vmatpush.msra.mxu0 0.0
    %704 = vmatpush.msra.mxu0 0.0
    %705 = vmatpush.msra.mxu0 0.0
    %706 = vmatpush.msra.mxu0 %v683
    %707 = vmatpush.msra.mxu0 %v682
    %708 = vmatpush.msra.mxu0 %v681
    %709 = vmatpush.msra.mxu0 %v680
    %710 = vmatmul.f32.gmra.mxu0 %v689
    %v711 = vpop.f32.mrf.mxu0
    %v712 = vadd.f32 %v686, %v711
    %713 = vmatmul.f32.gmra.mxu0 %v692
    %v714 = vpop.f32.mrf.mxu0
    %v715 = vadd.f32 %v686, %v714
    %716 = vdwg.mxu0
    %v717 = vmax.f32 %v712, 0.0
    %v718 = vmax.f32 %v715, 0.0
    %v719 = vld [vmem:[%s10] sm:$0xff]
    %v720 = vld [vmem:[%s10 + $0x8] sm:$0xff]
    %v721 = vld [vmem:[%s10 + $0x10] sm:$0xff]
    %v722 = vld [vmem:[%s10 + $0x18] sm:$0xff]
    %v723 = vld [vmem:[%s10 + $0x20] sm:$0xff]
    %v724 = vld [vmem:[%s10 + $0x28] sm:$0xff]
    %v725 = vld [vmem:[%s10 + $0x30] sm:$0xff]
    %v726 = vld [vmem:[%s10 + $0x38] sm:$0xff]
    %v727 = vld [vmem:[%s10 + $0x40] sm:$0xff]
    %v728 = vld [vmem:[%s10 + $0x48] sm:$0xff]
    %v729 = vld [vmem:[%s10 + $0x50] sm:$0xff]
    %v730 = vld [vmem:[%s10 + $0x58] sm:$0xff]
    %v731 = vld [vmem:[%s10 + $0x60] sm:$0xff]
    %v732 = vld [vmem:[%s10 + $0x68] sm:$0xff]
    %v733 = vld [vmem:[%s10 + $0x70] sm:$0xff]
    %v734 = vld [vmem:[%s10 + $0x78] sm:$0xff]
    %v735 = vld [vmem:[%s11] sm:$0x1]
    %v737 = vperm.slane %v735, 0
    %739 = vmatpush.msra.mxu0 %v734
    %740 = vmatpush.msra.mxu0 %v733
    %741 = vmatpush.msra.mxu0 %v732
    %742 = vmatpush.msra.mxu0 %v731
    %743 = vmatpush.msra.mxu0 %v730
    %744 = vmatpush.msra.mxu0 %v729
    %745 = vmatpush.msra.mxu0 %v728
    %746 = vmatpush.msra.mxu0 %v727
    %747 = vmatpush.msra.mxu0 %v726
    %748 = vmatpush.msra.mxu0 %v725
    %749 = vmatpush.msra.mxu0 %v724
    %750 = vmatpush.msra.mxu0 %v723
    %751 = vmatpush.msra.mxu0 %v722
    %752 = vmatpush.msra.mxu0 %v721
    %753 = vmatpush.msra.mxu0 %v720
    %754 = vmatpush.msra.mxu0 %v719
    %755 = vmatmul.f32.gmra.mxu0 %v717
    %v756 = vpop.f32.mrf.mxu0
    %v757 = vadd.f32 %v737, %v756
    %758 = vmatmul.f32.gmra.mxu0 %v718
    %v759 = vpop.f32.mrf.mxu0
    %v760 = vadd.f32 %v737, %v759
    %761 = vdwg.mxu0
    %v762 = vadd.f32 %v678, %v757
    %v763 = vadd.f32 %v679, %v760
    %v764 = vld [vmem:[%s12] sm:$0x1]
    %v765 = vld [vmem:[%s13] sm:$0x1]
    %v766 = vsel %vm66, %v762, 0.0
    %767 = vadd.xlane.f32.xlu0 %v766
    %v768 = vpop.xlane.xlu0 %767
    %v769 = vsel %vm66, %v763, 0.0
    %770 = vadd.xlane.f32.xlu0 %v769
    %v771 = vpop.xlane.xlu0 %770
    %v772 = vmul.f32 %v768, %v631
    %v773 = vmul.f32 %v771, %v631
    %v774 = vsub.f32 %v762, %v772
    %v775 = vsub.f32 %v763, %v773
    %v776 = vmul.f32 %v774, %v774
    %v777 = vmul.f32 %v775, %v775
    %v778 = vsel %vm66, %v776, 0.0
    %779 = vadd.xlane.f32.xlu0 %v778
    %v780 = vpop.xlane.xlu0 %779
    %v781 = vsel %vm66, %v777, 0.0
    %782 = vadd.xlane.f32.xlu0 %v781
    %v783 = vpop.xlane.xlu0 %782
    %v784 = vmul.f32 %v780, %v631
    %v785 = vmul.f32 %v783, %v631
    %v786 = vadd.f32 %v784, 1e-05
    %v787 = vadd.f32 %v785, 1e-05
    %v788 = vrsqrt.pop %v786
    %v789 = vmul.f32 %v788, %v786
    %v790 = vmul.f32 %v789, %v788
    %v791 = vmul.f32 0.5, %v790
    %v792 = vsub.f32 1.5, %v791
    %v793 = vmul.f32 %v788, %v792
    %vm794 = vweird.f32 %v786
    %vm795 = vweird.f32 %v788
    %vm796 = vmor %vm794, %vm795
    %v797 = vsel %vm796, %v788, %v793
    %v798 = vrsqrt.pop %v787
    %v799 = vmul.f32 %v798, %v787
    %v800 = vmul.f32 %v799, %v798
    %v801 = vmul.f32 0.5, %v800
    %v802 = vsub.f32 1.5, %v801
    %v803 = vmul.f32 %v798, %v802
    %vm804 = vweird.f32 %v787
    %vm805 = vweird.f32 %v798
    %vm806 = vmor %vm804, %vm805
    %v807 = vsel %vm806, %v798, %v803
    %v808 = vmul.f32 %v774, %v797
    %v809 = vmul.f32 %v775, %v807
    %v811 = vperm.slane %v764, 0
    %v813 = vmul.f32 %v808, %v811
    %v814 = vmul.f32 %v809, %v811
    %v816 = vperm.slane %v765, 0
    %v818 = vadd.f32 %v813, %v816
    %v819 = vadd.f32 %v814, %v816
    %820 = vst.msk [vmem:[#allocation2] sm:$0xff] %vm66, %v818
    %821 = vst.msk [vmem:[#allocation2 + $0x8] sm:$0xff] %vm66, %v819
    // Predicated region
    $region74: #{tpu_custom_call.1} parent=1 // pred_check
      _
    $region75: #{tpu_custom_call.1} parent=1 // pred_check_branch
      %823 = sbr.rel (0) target = $region77
    $region76: #{tpu_custom_call.1} parent=1 // pred_region
      %825 = vsyncadd [#allocation3], 0
      %s826 = sshll.u32 [#allocation2], 4
      %s827 = int_to_ptr.vmem [resolvable:$true] %s826
      %s828 = sshll.u32 %s18, 4
      %s829 = int_to_ptr.hbm [resolvable:$true] %s828
      %834 = dma.vmem_to_hbm [thread:$0]  %s827, 256, %s829, [#allocation3], 128, 128, 8
    $region77: #{tpu_custom_call.1} parent=1 // pred_fallthru
      _
    // Predicated region
    $region78: #{tpu_custom_call.1} parent=1 // pred_check
      _
    $region79: #{tpu_custom_call.1} parent=1 // pred_check_branch
      %836 = sbr.rel (0) target = $region81
    $region80: #{tpu_custom_call.1} parent=1 // pred_region
      %838 = dma.done [#allocation3], 256
    $region81: #{tpu_custom_call.1} parent=1 // pred_fallthru
      _
    %839 = vsyncpa [#allocation3], 1

</llo_original>
